<compile_context>
chip_gen: v5e
topology: v5e:2x2
jax: 0.10.0
libtpu: 0.0.40
codegen_flags: <defaults>
</compile_context>

<pallas_src>
import jax
import jax.numpy as jnp
from jax.experimental import pallas as pl
from jax.experimental.pallas import tpu as pltpu


# ----------------------------------------------------------------------------
# Pallas kernel
# ----------------------------------------------------------------------------
def mynetwork_kernel(
    # activations (separate real / imag operands, no wrapper concat)
    rr_ref,           # (bm, r_dim)
    ri_ref,           # (bm, r_dim)
    ur_ref,           # (bm, U_dim)
    ui_ref,           # (bm, U_dim)
    # U_linear, row-split for the separate real/imag inputs:
    w1t_ref,          # (U_dim, 128)  = [Wr | Wi]      (applied to U_real)
    w1b_ref,          # (U_dim, 128)  = [-Wi | Wr]     (applied to U_imag)
    b1_ref,           # (1, 128)      = [br-bi | br+bi]
    # fused ComplexLinear weights/biases: W2 = [[Wr, Wi], [-Wi, Wr]], b2 = [br-bi | br+bi]
    w2_ref, b2_ref,   # U_linear2  (128 -> 64)
    w3_ref, b3_ref,   # U_linear3  (64 -> 64)
    w4_ref, b4_ref,   # U_linear4  (64 -> 64)   -- applied twice
    w6_ref, b6_ref,   # U_linear6  (64 -> 64)
    # final ComplexLinear; [r | Up] concat avoided by pre-splitting rows:
    wfrt_ref,         # (r_dim, 2*z_dim)  r_real rows
    wfrb_ref,         # (r_dim, 2*z_dim)  r_imag rows
    wfu_ref,          # (64,    2*z_dim)  Up rows (fused 2x2 block)
    bf_ref,           # (1,     2*z_dim)
    # outputs
    zr_ref,           # (bm, z_dim)
    zi_ref,           # (bm, z_dim)
):
    def fused_layer(x, w_ref, b_ref, relu):
        # One MXU matmul per ComplexLinear; f32 accumulation, f32 bias/ReLU.
        y = jnp.dot(x.astype(w_ref.dtype), w_ref[...],
                    preferred_element_type=jnp.float32) + b_ref[...]
        return jnp.maximum(y, 0.0) if relu else y

    # Layer 1: two dots against row-split fused weights (no input concat).
    x = (jnp.dot(ur_ref[...], w1t_ref[...], preferred_element_type=jnp.float32)
         + jnp.dot(ui_ref[...], w1b_ref[...], preferred_element_type=jnp.float32)
         + b1_ref[...])
    x = jnp.maximum(x, 0.0)

    x = fused_layer(x, w2_ref, b2_ref, relu=True)
    x = fused_layer(x, w3_ref, b3_ref, relu=True)
    x = fused_layer(x, w4_ref, b4_ref, relu=True)
    x = fused_layer(x, w4_ref, b4_ref, relu=True)    # U_linear4 applied twice (as in PyTorch)
    x = fused_layer(x, w6_ref, b6_ref, relu=False)   # no ReLU after U_linear6

    # Final layer on concat([r, Up]) without materializing any concat:
    #   [r_real | Up_real | r_imag | Up_imag] @ Wf
    #     == r_real @ Wf_rt + r_imag @ Wf_rb + [Up_real|Up_imag] @ Wf_u
    z = (jnp.dot(rr_ref[...], wfrt_ref[...], preferred_element_type=jnp.float32)
         + jnp.dot(ri_ref[...], wfrb_ref[...], preferred_element_type=jnp.float32)
         + jnp.dot(x.astype(wfu_ref.dtype), wfu_ref[...], preferred_element_type=jnp.float32)
         + bf_ref[...])

    zd = zr_ref.shape[-1]
    zr_ref[...] = z[:, :zd].astype(zr_ref.dtype)
    zi_ref[...] = z[:, zd:].astype(zi_ref.dtype)


# ----------------------------------------------------------------------------
# Wrapper-side parameter preparation (fusion / splitting / bias combination)
# ----------------------------------------------------------------------------
def _fuse_complex_linear(wr, br, wi, bi, matmul_dtype):
    """Complex multiply as a real 2x2 block matrix; biases pre-combined (f32)."""
    w2 = jnp.concatenate(
        [jnp.concatenate([wr, wi], axis=1),
         jnp.concatenate([-wi, wr], axis=1)], axis=0)          # (2*in, 2*out)
    b2 = jnp.concatenate([br - bi, br + bi], axis=1)           # (1, 2*out)
    return w2.astype(matmul_dtype), b2.astype(jnp.float32)


def _split_complex_rows(wr, wi, matmul_dtype):
    """Row-split fused weights for separate real/imag inputs."""
    top = jnp.concatenate([wr, wi], axis=1)    # applied to the real input
    bot = jnp.concatenate([-wi, wr], axis=1)   # applied to the imag input
    return top.astype(matmul_dtype), bot.astype(matmul_dtype)


def prepare_params(params, *, r_dim, matmul_dtype=jnp.bfloat16):
    """params = (p1, p2, p3, p4, p6, pf); each p = (wr, br, wi, bi), weights (in, out)."""
    p1, p2, p3, p4, p6, pf = params

    # Layer 1: real/imag inputs arrive as separate operands -> row-split weights.
    w1r, b1r, w1i, b1i = p1
    w1_top, w1_bot = _split_complex_rows(w1r, w1i, matmul_dtype)
    b1 = jnp.concatenate([b1r - b1i, b1r + b1i], axis=1).astype(jnp.float32)

    flat = [w1_top, w1_bot, b1]
    for p in (p2, p3, p4, p6):
        w2, b2 = _fuse_complex_linear(*p, matmul_dtype=matmul_dtype)
        flat.extend([w2, b2])

    # Final layer: split rows between the r part (real/imag operands) and the Up part.
    wfr, bfr, wfi, bfi = pf
    wf_rt, wf_rb = _split_complex_rows(wfr[:r_dim], wfi[:r_dim], matmul_dtype)
    wf_u, bf = _fuse_complex_linear(wfr[r_dim:], bfr, wfi[r_dim:], bfi, matmul_dtype)
    flat.extend([wf_rt, wf_rb, wf_u, bf])
    return flat


# ----------------------------------------------------------------------------
# Forward wrapper
# ----------------------------------------------------------------------------
def _pick_batch_block(B, batch_block):
    if B > batch_block:
        return batch_block
    if B >= 1024:
        # Split into >= 2 blocks (multiple of 256) so the "parallel" batch axis
        # can actually shard across both v7x TensorCores.
        half = (B + 1) // 2
        return -(-half // 256) * 256
    return B


def mynetwork_forward(r_real, r_imag, u_real, u_imag, params, *, r_dim, z_dim,
                      matmul_dtype=jnp.bfloat16, batch_block=2048):
    B = r_real.shape[0]

    # Activations stored in the matmul dtype (bf16 default: halves input HBM bytes).
    acts = [a.astype(matmul_dtype) for a in (r_real, r_imag, u_real, u_imag)]
    flat_params = prepare_params(params, r_dim=r_dim, matmul_dtype=matmul_dtype)
    (w1t, w1b, b1, w2, b2, w3, b3, w4, b4, w6, b6, wf_rt, wf_rb, wf_u, bf) = flat_params

    bm = _pick_batch_block(B, batch_block)
    grid = (pl.cdiv(B, bm),)

    def act_spec(ncols):
        return pl.BlockSpec((bm, ncols), lambda i: (i, 0))

    def resident_spec(shape):
        return pl.BlockSpec(shape, lambda i: (0, 0))

    # TODO(synk): on v5e, if the activation DMA is exposed at step boundaries,
    # add pipeline_mode=pl.Buffered(3) to these four activation BlockSpecs.
    in_specs = [act_spec(a.shape[1]) for a in acts]
    in_specs += [resident_spec(p.shape) for p in flat_params]

    out_specs = (pl.BlockSpec((bm, z_dim), lambda i: (i, 0)),
                 pl.BlockSpec((bm, z_dim), lambda i: (i, 0)))
    out_shape = (jax.ShapeDtypeStruct((B, z_dim), jnp.float32),
                 jax.ShapeDtypeStruct((B, z_dim), jnp.float32))

    # Advisory cost hint (tiny network — helps XLA schedule around the call).
    mm_weights = [w1t, w1b, w2, w3, w4, w4, w6, wf_rt, wf_rb, wf_u]  # w4 used twice
    flops = sum(2 * B * w.shape[0] * w.shape[1] for w in mm_weights)
    bytes_accessed = (sum(int(a.size) * a.dtype.itemsize for a in acts)
                      + sum(int(p.size) * p.dtype.itemsize for p in flat_params)
                      + 2 * B * z_dim * 4)

    z_real, z_imag = pl.pallas_call(
        mynetwork_kernel,
        out_shape=out_shape,
        grid=grid,
        in_specs=in_specs,
        out_specs=out_specs,
        compiler_params=pltpu.CompilerParams(
            dimension_semantics=("parallel",),
            vmem_limit_bytes=32 * 1024 * 1024,   # safe on v7x (64 MiB phys), raises v5e default
        ),
        cost_estimate=pl.CostEstimate(flops=flops, transcendentals=0,
                                      bytes_accessed=bytes_accessed),
    )(*acts, *flat_params)

    return z_real, z_imag


# ----------------------------------------------------------------------------
# Parameter init and pure-JAX reference
# ----------------------------------------------------------------------------
def init_complex_linear(key, in_features, out_features):
    """Deterministic init; weights stored (in, out), biases (1, out)."""
    k1, k2, k3, k4 = jax.random.split(key, 4)
    bound = 1.0 / jnp.sqrt(in_features)
    wr = jax.random.uniform(k1, (in_features, out_features), jnp.float32, -bound, bound)
    br = jax.random.uniform(k2, (1, out_features), jnp.float32, -bound, bound)
    wi = jax.random.uniform(k3, (in_features, out_features), jnp.float32, -bound, bound)
    bi = jax.random.uniform(k4, (1, out_features), jnp.float32, -bound, bound)
    return (wr, br, wi, bi)


def reference_forward(r_real, r_imag, u_real, u_imag, params):
    """Pure-JAX reference mirroring the PyTorch forward exactly."""
    def clin(xr, xi, p):
        wr, br, wi, bi = p
        real = (xr @ wr + br) - (xi @ wi + bi)
        imag = (xi @ wr + br) + (xr @ wi + bi)
        return real, imag

    l1, l2, l3, l4, l6, lf = params
    up_r, up_i = clin(u_real, u_imag, l1)
    up_r, up_i = jnp.maximum(up_r, 0), jnp.maximum(up_i, 0)
    up_r, up_i = clin(up_r, up_i, l2)
    up_r, up_i = jnp.maximum(up_r, 0), jnp.maximum(up_i, 0)
    up_r, up_i = clin(up_r, up_i, l3)
    up_r, up_i = jnp.maximum(up_r, 0), jnp.maximum(up_i, 0)
    up_r, up_i = clin(up_r, up_i, l4)
    up_r, up_i = jnp.maximum(up_r, 0), jnp.maximum(up_i, 0)
    up_r, up_i = clin(up_r, up_i, l4)    # U_linear4 applied twice (as in PyTorch)
    up_r, up_i = jnp.maximum(up_r, 0), jnp.maximum(up_i, 0)
    up_r, up_i = clin(up_r, up_i, l6)    # no ReLU after U_linear6
    cr = jnp.concatenate([r_real, up_r], axis=1)
    ci = jnp.concatenate([r_imag, up_i], axis=1)
    return clin(cr, ci, lf)


# ----------------------------------------------------------------------------
# Demo / self-test
# ----------------------------------------------------------------------------
if __name__ == "__main__":
    r_dim, U_dim, z_dim = 16, 32, 8

    key = jax.random.PRNGKey(0)
    keys = jax.random.split(key, 12)

    # U_linear5 exists in the module but is never used in forward; initialized
    # for shape parity and simply not passed on.
    p1 = init_complex_linear(keys[0], U_dim, 64)
    p2 = init_complex_linear(keys[1], 64, 32)
    p3 = init_complex_linear(keys[2], 32, 32)
    p4 = init_complex_linear(keys[3], 32, 32)
    _p5_unused = init_complex_linear(keys[4], 32, 32)
    p6 = init_complex_linear(keys[5], 32, 32)
    pf = init_complex_linear(keys[6], r_dim + 32, z_dim)
    params = (p1, p2, p3, p4, p6, pf)

    # --- Small-batch check ----------------------------------------------------
    B = 8
    r_real = jax.random.normal(keys[7], (B, r_dim), jnp.float32)
    r_imag = jax.random.normal(keys[8], (B, r_dim), jnp.float32)
    u_real = jax.random.normal(keys[9], (B, U_dim), jnp.float32)
    u_imag = jax.random.normal(keys[10], (B, U_dim), jnp.float32)

    ref_real, ref_imag = reference_forward(r_real, r_imag, u_real, u_imag, params)

    # f32 matmul path: tight check.
    z_real, z_imag = mynetwork_forward(
        r_real, r_imag, u_real, u_imag, params, r_dim=r_dim, z_dim=z_dim,
        matmul_dtype=jnp.float32)
    jax.block_until_ready((z_real, z_imag))
    assert z_real.shape == (B, z_dim) and z_imag.shape == (B, z_dim)
    assert jnp.allclose(z_real, ref_real, atol=1e-4, rtol=1e-4)
    assert jnp.allclose(z_imag, ref_imag, atol=1e-4, rtol=1e-4)

    # bf16 default path (f32 accumulation): loose check.
    zb_real, zb_imag = mynetwork_forward(
        r_real, r_imag, u_real, u_imag, params, r_dim=r_dim, z_dim=z_dim)
    jax.block_until_ready((zb_real, zb_imag))
    assert jnp.allclose(zb_real, ref_real, atol=5e-1, rtol=1e-1)
    assert jnp.allclose(zb_imag, ref_imag, atol=5e-1, rtol=1e-1)

    # --- Multi-block (grid > 1, partial last block) check, f32 ----------------
    B2 = 1040
    kr = jax.random.split(keys[11], 4)
    r_real2 = jax.random.normal(kr[0], (B2, r_dim), jnp.float32)
    r_imag2 = jax.random.normal(kr[1], (B2, r_dim), jnp.float32)
    u_real2 = jax.random.normal(kr[2], (B2, U_dim), jnp.float32)
    u_imag2 = jax.random.normal(kr[3], (B2, U_dim), jnp.float32)

    ref2_real, ref2_imag = reference_forward(r_real2, r_imag2, u_real2, u_imag2, params)
    z2_real, z2_imag = mynetwork_forward(
        r_real2, r_imag2, u_real2, u_imag2, params, r_dim=r_dim, z_dim=z_dim,
        matmul_dtype=jnp.float32)
    jax.block_until_ready((z2_real, z2_imag))
    assert z2_real.shape == (B2, z_dim) and z2_imag.shape == (B2, z_dim)
    assert jnp.allclose(z2_real, ref2_real, atol=1e-4, rtol=1e-4)
    assert jnp.allclose(z2_imag, ref2_imag, atol=1e-4, rtol=1e-4)

    print("KERNEL_OK")
</pallas_src>

<mosaic_0001>
module attributes {stable_mosaic.version = 11 : i64} {
  func.func @mynetwork_kernel(%arg0: i32, %arg1: memref<8x16xf32, #tpu.memory_space<vmem>>, %arg2: memref<8x16xf32, #tpu.memory_space<vmem>>, %arg3: memref<8x32xf32, #tpu.memory_space<vmem>>, %arg4: memref<8x32xf32, #tpu.memory_space<vmem>>, %arg5: memref<32x128xf32, #tpu.memory_space<vmem>>, %arg6: memref<32x128xf32, #tpu.memory_space<vmem>>, %arg7: memref<1x128xf32, #tpu.memory_space<vmem>>, %arg8: memref<128x64xf32, #tpu.memory_space<vmem>>, %arg9: memref<1x64xf32, #tpu.memory_space<vmem>>, %arg10: memref<64x64xf32, #tpu.memory_space<vmem>>, %arg11: memref<1x64xf32, #tpu.memory_space<vmem>>, %arg12: memref<64x64xf32, #tpu.memory_space<vmem>>, %arg13: memref<1x64xf32, #tpu.memory_space<vmem>>, %arg14: memref<64x64xf32, #tpu.memory_space<vmem>>, %arg15: memref<1x64xf32, #tpu.memory_space<vmem>>, %arg16: memref<16x16xf32, #tpu.memory_space<vmem>>, %arg17: memref<16x16xf32, #tpu.memory_space<vmem>>, %arg18: memref<64x16xf32, #tpu.memory_space<vmem>>, %arg19: memref<1x16xf32, #tpu.memory_space<vmem>>, %arg20: memref<8x8xf32, #tpu.memory_space<vmem>>, %arg21: memref<8x8xf32, #tpu.memory_space<vmem>>) attributes {dimension_semantics = [#tpu.dimension_semantics<parallel>], iteration_bounds = array<i64: 1>, scalar_prefetch = 0 : i64, scratch_operands = 0 : i64, tpu.core_type = #tpu.core_type<tc>, window_params = [{transform_indices = @transform_0, window_bounds = array<i64: 8, 16>}, {transform_indices = @transform_1, window_bounds = array<i64: 8, 16>}, {transform_indices = @transform_2, window_bounds = array<i64: 8, 32>}, {transform_indices = @transform_3, window_bounds = array<i64: 8, 32>}, {pipeline_mode = #tpu.pipeline_mode<synchronous>, transform_indices = @transform_4, window_bounds = array<i64: 32, 128>}, {pipeline_mode = #tpu.pipeline_mode<synchronous>, transform_indices = @transform_5, window_bounds = array<i64: 32, 128>}, {pipeline_mode = #tpu.pipeline_mode<synchronous>, transform_indices = @transform_6, window_bounds = array<i64: 1, 128>}, {pipeline_mode = #tpu.pipeline_mode<synchronous>, transform_indices = @transform_7, window_bounds = array<i64: 128, 64>}, {pipeline_mode = #tpu.pipeline_mode<synchronous>, transform_indices = @transform_8, window_bounds = array<i64: 1, 64>}, {pipeline_mode = #tpu.pipeline_mode<synchronous>, transform_indices = @transform_9, window_bounds = array<i64: 64, 64>}, {pipeline_mode = #tpu.pipeline_mode<synchronous>, transform_indices = @transform_10, window_bounds = array<i64: 1, 64>}, {pipeline_mode = #tpu.pipeline_mode<synchronous>, transform_indices = @transform_11, window_bounds = array<i64: 64, 64>}, {pipeline_mode = #tpu.pipeline_mode<synchronous>, transform_indices = @transform_12, window_bounds = array<i64: 1, 64>}, {pipeline_mode = #tpu.pipeline_mode<synchronous>, transform_indices = @transform_13, window_bounds = array<i64: 64, 64>}, {pipeline_mode = #tpu.pipeline_mode<synchronous>, transform_indices = @transform_14, window_bounds = array<i64: 1, 64>}, {pipeline_mode = #tpu.pipeline_mode<synchronous>, transform_indices = @transform_15, window_bounds = array<i64: 16, 16>}, {pipeline_mode = #tpu.pipeline_mode<synchronous>, transform_indices = @transform_16, window_bounds = array<i64: 16, 16>}, {pipeline_mode = #tpu.pipeline_mode<synchronous>, transform_indices = @transform_17, window_bounds = array<i64: 64, 16>}, {pipeline_mode = #tpu.pipeline_mode<synchronous>, transform_indices = @transform_18, window_bounds = array<i64: 1, 16>}, {transform_indices = @transform_19, window_bounds = array<i64: 8, 8>}, {transform_indices = @transform_20, window_bounds = array<i64: 8, 8>}]} {
    %c0 = arith.constant 0 : index
    %c0_0 = arith.constant 0 : index
    %0 = vector.load %arg3[%c0, %c0_0] : memref<8x32xf32, #tpu.memory_space<vmem>>, vector<8x32xf32>
    %c0_1 = arith.constant 0 : index
    %c0_2 = arith.constant 0 : index
    %1 = vector.load %arg5[%c0_1, %c0_2] : memref<32x128xf32, #tpu.memory_space<vmem>>, vector<32x128xf32>
    %cst = arith.constant dense<0.000000e+00> : vector<8x128xf32>
    %2 = tpu.matmul %0, %1, %cst {dimension_numbers = #tpu.dot_dimension_numbers<[1], [0], [0], [1], [0, 0, 1, 1], [], []>} : vector<8x32xf32>, vector<32x128xf32>, vector<8x128xf32> -> vector<8x128xf32>
    %c0_3 = arith.constant 0 : index
    %c0_4 = arith.constant 0 : index
    %3 = vector.load %arg4[%c0_3, %c0_4] : memref<8x32xf32, #tpu.memory_space<vmem>>, vector<8x32xf32>
    %c0_5 = arith.constant 0 : index
    %c0_6 = arith.constant 0 : index
    %4 = vector.load %arg6[%c0_5, %c0_6] : memref<32x128xf32, #tpu.memory_space<vmem>>, vector<32x128xf32>
    %cst_7 = arith.constant dense<0.000000e+00> : vector<8x128xf32>
    %5 = tpu.matmul %3, %4, %cst_7 {dimension_numbers = #tpu.dot_dimension_numbers<[1], [0], [0], [1], [0, 0, 1, 1], [], []>} : vector<8x32xf32>, vector<32x128xf32>, vector<8x128xf32> -> vector<8x128xf32>
    %6 = arith.addf %2, %5 : vector<8x128xf32>
    %c0_8 = arith.constant 0 : index
    %c0_9 = arith.constant 0 : index
    %7 = vector.load %arg7[%c0_8, %c0_9] : memref<1x128xf32, #tpu.memory_space<vmem>>, vector<1x128xf32>
    %8 = vector.broadcast %7 : vector<1x128xf32> to vector<8x128xf32>
    %9 = arith.addf %6, %8 : vector<8x128xf32>
    %cst_10 = arith.constant 0.000000e+00 : f32
    %10 = vector.broadcast %cst_10 : f32 to vector<8x128xf32>
    %11 = arith.maximumf %9, %10 : vector<8x128xf32>
    %c0_11 = arith.constant 0 : index
    %c0_12 = arith.constant 0 : index
    %12 = vector.load %arg8[%c0_11, %c0_12] : memref<128x64xf32, #tpu.memory_space<vmem>>, vector<128x64xf32>
    %cst_13 = arith.constant dense<0.000000e+00> : vector<8x64xf32>
    %13 = tpu.matmul %11, %12, %cst_13 {dimension_numbers = #tpu.dot_dimension_numbers<[1], [0], [0], [1], [0, 0, 1, 1], [], []>} : vector<8x128xf32>, vector<128x64xf32>, vector<8x64xf32> -> vector<8x64xf32>
    %c0_14 = arith.constant 0 : index
    %c0_15 = arith.constant 0 : index
    %14 = vector.load %arg9[%c0_14, %c0_15] : memref<1x64xf32, #tpu.memory_space<vmem>>, vector<1x64xf32>
    %15 = vector.broadcast %14 : vector<1x64xf32> to vector<8x64xf32>
    %16 = arith.addf %13, %15 : vector<8x64xf32>
    %cst_16 = arith.constant 0.000000e+00 : f32
    %17 = vector.broadcast %cst_16 : f32 to vector<8x64xf32>
    %18 = arith.maximumf %16, %17 : vector<8x64xf32>
    %c0_17 = arith.constant 0 : index
    %c0_18 = arith.constant 0 : index
    %19 = vector.load %arg10[%c0_17, %c0_18] : memref<64x64xf32, #tpu.memory_space<vmem>>, vector<64x64xf32>
    %cst_19 = arith.constant dense<0.000000e+00> : vector<8x64xf32>
    %20 = tpu.matmul %18, %19, %cst_19 {dimension_numbers = #tpu.dot_dimension_numbers<[1], [0], [0], [1], [0, 0, 1, 1], [], []>} : vector<8x64xf32>, vector<64x64xf32>, vector<8x64xf32> -> vector<8x64xf32>
    %c0_20 = arith.constant 0 : index
    %c0_21 = arith.constant 0 : index
    %21 = vector.load %arg11[%c0_20, %c0_21] : memref<1x64xf32, #tpu.memory_space<vmem>>, vector<1x64xf32>
    %22 = vector.broadcast %21 : vector<1x64xf32> to vector<8x64xf32>
    %23 = arith.addf %20, %22 : vector<8x64xf32>
    %cst_22 = arith.constant 0.000000e+00 : f32
    %24 = vector.broadcast %cst_22 : f32 to vector<8x64xf32>
    %25 = arith.maximumf %23, %24 : vector<8x64xf32>
    %c0_23 = arith.constant 0 : index
    %c0_24 = arith.constant 0 : index
    %26 = vector.load %arg12[%c0_23, %c0_24] : memref<64x64xf32, #tpu.memory_space<vmem>>, vector<64x64xf32>
    %cst_25 = arith.constant dense<0.000000e+00> : vector<8x64xf32>
    %27 = tpu.matmul %25, %26, %cst_25 {dimension_numbers = #tpu.dot_dimension_numbers<[1], [0], [0], [1], [0, 0, 1, 1], [], []>} : vector<8x64xf32>, vector<64x64xf32>, vector<8x64xf32> -> vector<8x64xf32>
    %c0_26 = arith.constant 0 : index
    %c0_27 = arith.constant 0 : index
    %28 = vector.load %arg13[%c0_26, %c0_27] : memref<1x64xf32, #tpu.memory_space<vmem>>, vector<1x64xf32>
    %29 = vector.broadcast %28 : vector<1x64xf32> to vector<8x64xf32>
    %30 = arith.addf %27, %29 : vector<8x64xf32>
    %cst_28 = arith.constant 0.000000e+00 : f32
    %31 = vector.broadcast %cst_28 : f32 to vector<8x64xf32>
    %32 = arith.maximumf %30, %31 : vector<8x64xf32>
    %c0_29 = arith.constant 0 : index
    %c0_30 = arith.constant 0 : index
    %33 = vector.load %arg12[%c0_29, %c0_30] : memref<64x64xf32, #tpu.memory_space<vmem>>, vector<64x64xf32>
    %cst_31 = arith.constant dense<0.000000e+00> : vector<8x64xf32>
    %34 = tpu.matmul %32, %33, %cst_31 {dimension_numbers = #tpu.dot_dimension_numbers<[1], [0], [0], [1], [0, 0, 1, 1], [], []>} : vector<8x64xf32>, vector<64x64xf32>, vector<8x64xf32> -> vector<8x64xf32>
    %c0_32 = arith.constant 0 : index
    %c0_33 = arith.constant 0 : index
    %35 = vector.load %arg13[%c0_32, %c0_33] : memref<1x64xf32, #tpu.memory_space<vmem>>, vector<1x64xf32>
    %36 = vector.broadcast %35 : vector<1x64xf32> to vector<8x64xf32>
    %37 = arith.addf %34, %36 : vector<8x64xf32>
    %cst_34 = arith.constant 0.000000e+00 : f32
    %38 = vector.broadcast %cst_34 : f32 to vector<8x64xf32>
    %39 = arith.maximumf %37, %38 : vector<8x64xf32>
    %c0_35 = arith.constant 0 : index
    %c0_36 = arith.constant 0 : index
    %40 = vector.load %arg14[%c0_35, %c0_36] : memref<64x64xf32, #tpu.memory_space<vmem>>, vector<64x64xf32>
    %cst_37 = arith.constant dense<0.000000e+00> : vector<8x64xf32>
    %41 = tpu.matmul %39, %40, %cst_37 {dimension_numbers = #tpu.dot_dimension_numbers<[1], [0], [0], [1], [0, 0, 1, 1], [], []>} : vector<8x64xf32>, vector<64x64xf32>, vector<8x64xf32> -> vector<8x64xf32>
    %c0_38 = arith.constant 0 : index
    %c0_39 = arith.constant 0 : index
    %42 = vector.load %arg15[%c0_38, %c0_39] : memref<1x64xf32, #tpu.memory_space<vmem>>, vector<1x64xf32>
    %43 = vector.broadcast %42 : vector<1x64xf32> to vector<8x64xf32>
    %44 = arith.addf %41, %43 : vector<8x64xf32>
    %c0_40 = arith.constant 0 : index
    %c0_41 = arith.constant 0 : index
    %45 = vector.load %arg1[%c0_40, %c0_41] : memref<8x16xf32, #tpu.memory_space<vmem>>, vector<8x16xf32>
    %c0_42 = arith.constant 0 : index
    %c0_43 = arith.constant 0 : index
    %46 = vector.load %arg16[%c0_42, %c0_43] : memref<16x16xf32, #tpu.memory_space<vmem>>, vector<16x16xf32>
    %cst_44 = arith.constant dense<0.000000e+00> : vector<8x16xf32>
    %47 = tpu.matmul %45, %46, %cst_44 {dimension_numbers = #tpu.dot_dimension_numbers<[1], [0], [0], [1], [0, 0, 1, 1], [], []>} : vector<8x16xf32>, vector<16x16xf32>, vector<8x16xf32> -> vector<8x16xf32>
    %c0_45 = arith.constant 0 : index
    %c0_46 = arith.constant 0 : index
    %48 = vector.load %arg2[%c0_45, %c0_46] : memref<8x16xf32, #tpu.memory_space<vmem>>, vector<8x16xf32>
    %c0_47 = arith.constant 0 : index
    %c0_48 = arith.constant 0 : index
    %49 = vector.load %arg17[%c0_47, %c0_48] : memref<16x16xf32, #tpu.memory_space<vmem>>, vector<16x16xf32>
    %cst_49 = arith.constant dense<0.000000e+00> : vector<8x16xf32>
    %50 = tpu.matmul %48, %49, %cst_49 {dimension_numbers = #tpu.dot_dimension_numbers<[1], [0], [0], [1], [0, 0, 1, 1], [], []>} : vector<8x16xf32>, vector<16x16xf32>, vector<8x16xf32> -> vector<8x16xf32>
    %51 = arith.addf %47, %50 : vector<8x16xf32>
    %c0_50 = arith.constant 0 : index
    %c0_51 = arith.constant 0 : index
    %52 = vector.load %arg18[%c0_50, %c0_51] : memref<64x16xf32, #tpu.memory_space<vmem>>, vector<64x16xf32>
    %cst_52 = arith.constant dense<0.000000e+00> : vector<8x16xf32>
    %53 = tpu.matmul %44, %52, %cst_52 {dimension_numbers = #tpu.dot_dimension_numbers<[1], [0], [0], [1], [0, 0, 1, 1], [], []>} : vector<8x64xf32>, vector<64x16xf32>, vector<8x16xf32> -> vector<8x16xf32>
    %54 = arith.addf %51, %53 : vector<8x16xf32>
    %c0_53 = arith.constant 0 : index
    %c0_54 = arith.constant 0 : index
    %55 = vector.load %arg19[%c0_53, %c0_54] : memref<1x16xf32, #tpu.memory_space<vmem>>, vector<1x16xf32>
    %56 = vector.broadcast %55 : vector<1x16xf32> to vector<8x16xf32>
    %57 = arith.addf %54, %56 : vector<8x16xf32>
    %58 = vector.extract_strided_slice %57 {offsets = [0, 0], sizes = [8, 8], strides = [1, 1]} : vector<8x16xf32> to vector<8x8xf32>
    %c0_55 = arith.constant 0 : index
    %c0_56 = arith.constant 0 : index
    %59 = vector.load %arg20[%c0_55, %c0_56] : memref<8x8xf32, #tpu.memory_space<vmem>>, vector<8x8xf32>
    tpu.vector_store %arg20[%c0_55, %c0_56], %58 {strides = array<i32>} : memref<8x8xf32, #tpu.memory_space<vmem>>, vector<8x8xf32>,
    %60 = vector.extract_strided_slice %57 {offsets = [0, 8], sizes = [8, 8], strides = [1, 1]} : vector<8x16xf32> to vector<8x8xf32>
    %c0_57 = arith.constant 0 : index
    %c0_58 = arith.constant 0 : index
    %61 = vector.load %arg21[%c0_57, %c0_58] : memref<8x8xf32, #tpu.memory_space<vmem>>, vector<8x8xf32>
    tpu.vector_store %arg21[%c0_57, %c0_58], %60 {strides = array<i32>} : memref<8x8xf32, #tpu.memory_space<vmem>>, vector<8x8xf32>,
    return
  }
  func.func @transform_0(%arg0: i32) -> (i32, i32) {
    %c0_i32 = arith.constant 0 : i32
    %c0_i32_0 = arith.constant 0 : i32
    return %arg0, %c0_i32 : i32, i32
  }
  func.func @transform_1(%arg0: i32) -> (i32, i32) {
    %c0_i32 = arith.constant 0 : i32
    %c0_i32_0 = arith.constant 0 : i32
    return %arg0, %c0_i32 : i32, i32
  }
  func.func @transform_2(%arg0: i32) -> (i32, i32) {
    %c0_i32 = arith.constant 0 : i32
    %c0_i32_0 = arith.constant 0 : i32
    return %arg0, %c0_i32 : i32, i32
  }
  func.func @transform_3(%arg0: i32) -> (i32, i32) {
    %c0_i32 = arith.constant 0 : i32
    %c0_i32_0 = arith.constant 0 : i32
    return %arg0, %c0_i32 : i32, i32
  }
  func.func @transform_4(%arg0: i32) -> (i32, i32) {
    %c0_i32 = arith.constant 0 : i32
    %c0_i32_0 = arith.constant 0 : i32
    %c0_i32_1 = arith.constant 0 : i32
    return %c0_i32, %c0_i32_0 : i32, i32
  }
  func.func @transform_5(%arg0: i32) -> (i32, i32) {
    %c0_i32 = arith.constant 0 : i32
    %c0_i32_0 = arith.constant 0 : i32
    %c0_i32_1 = arith.constant 0 : i32
    return %c0_i32, %c0_i32_0 : i32, i32
  }
  func.func @transform_6(%arg0: i32) -> (i32, i32) {
    %c0_i32 = arith.constant 0 : i32
    %c0_i32_0 = arith.constant 0 : i32
    %c0_i32_1 = arith.constant 0 : i32
    return %c0_i32, %c0_i32_0 : i32, i32
  }
  func.func @transform_7(%arg0: i32) -> (i32, i32) {
    %c0_i32 = arith.constant 0 : i32
    %c0_i32_0 = arith.constant 0 : i32
    %c0_i32_1 = arith.constant 0 : i32
    return %c0_i32, %c0_i32_0 : i32, i32
  }
  func.func @transform_8(%arg0: i32) -> (i32, i32) {
    %c0_i32 = arith.constant 0 : i32
    %c0_i32_0 = arith.constant 0 : i32
    %c0_i32_1 = arith.constant 0 : i32
    return %c0_i32, %c0_i32_0 : i32, i32
  }
  func.func @transform_9(%arg0: i32) -> (i32, i32) {
    %c0_i32 = arith.constant 0 : i32
    %c0_i32_0 = arith.constant 0 : i32
    %c0_i32_1 = arith.constant 0 : i32
    return %c0_i32, %c0_i32_0 : i32, i32
  }
  func.func @transform_10(%arg0: i32) -> (i32, i32) {
    %c0_i32 = arith.constant 0 : i32
    %c0_i32_0 = arith.constant 0 : i32
    %c0_i32_1 = arith.constant 0 : i32
    return %c0_i32, %c0_i32_0 : i32, i32
  }
  func.func @transform_11(%arg0: i32) -> (i32, i32) {
    %c0_i32 = arith.constant 0 : i32
    %c0_i32_0 = arith.constant 0 : i32
    %c0_i32_1 = arith.constant 0 : i32
    return %c0_i32, %c0_i32_0 : i32, i32
  }
  func.func @transform_12(%arg0: i32) -> (i32, i32) {
    %c0_i32 = arith.constant 0 : i32
    %c0_i32_0 = arith.constant 0 : i32
    %c0_i32_1 = arith.constant 0 : i32
    return %c0_i32, %c0_i32_0 : i32, i32
  }
  func.func @transform_13(%arg0: i32) -> (i32, i32) {
    %c0_i32 = arith.constant 0 : i32
    %c0_i32_0 = arith.constant 0 : i32
    %c0_i32_1 = arith.constant 0 : i32
    return %c0_i32, %c0_i32_0 : i32, i32
  }
  func.func @transform_14(%arg0: i32) -> (i32, i32) {
    %c0_i32 = arith.constant 0 : i32
    %c0_i32_0 = arith.constant 0 : i32
    %c0_i32_1 = arith.constant 0 : i32
    return %c0_i32, %c0_i32_0 : i32, i32
  }
  func.func @transform_15(%arg0: i32) -> (i32, i32) {
    %c0_i32 = arith.constant 0 : i32
    %c0_i32_0 = arith.constant 0 : i32
    %c0_i32_1 = arith.constant 0 : i32
    return %c0_i32, %c0_i32_0 : i32, i32
  }
  func.func @transform_16(%arg0: i32) -> (i32, i32) {
    %c0_i32 = arith.constant 0 : i32
    %c0_i32_0 = arith.constant 0 : i32
    %c0_i32_1 = arith.constant 0 : i32
    return %c0_i32, %c0_i32_0 : i32, i32
  }
  func.func @transform_17(%arg0: i32) -> (i32, i32) {
    %c0_i32 = arith.constant 0 : i32
    %c0_i32_0 = arith.constant 0 : i32
    %c0_i32_1 = arith.constant 0 : i32
    return %c0_i32, %c0_i32_0 : i32, i32
  }
  func.func @transform_18(%arg0: i32) -> (i32, i32) {
    %c0_i32 = arith.constant 0 : i32
    %c0_i32_0 = arith.constant 0 : i32
    %c0_i32_1 = arith.constant 0 : i32
    return %c0_i32, %c0_i32_0 : i32, i32
  }
  func.func @transform_19(%arg0: i32) -> (i32, i32) {
    %c0_i32 = arith.constant 0 : i32
    %c0_i32_0 = arith.constant 0 : i32
    return %arg0, %c0_i32 : i32, i32
  }
  func.func @transform_20(%arg0: i32) -> (i32, i32) {
    %c0_i32 = arith.constant 0 : i32
    %c0_i32_0 = arith.constant 0 : i32
    return %arg0, %c0_i32 : i32, i32
  }
}

</mosaic_0001>

<llo_original>
// kernel: tpu_custom_call.1
$region0: #{tpu_custom_call.1}
  #allocation0 [shape = 'u32[]', space=smem, size = 0x4, offset = 0x4, fixed_abs, tag = 'smem constant byte address 0x4 - core index']
  #allocation1 [shape = 'u32[72,128]{1,0:T(1,128)}', space=vmem, size = 0x9000, scoped, tag = 'internal scratch']
  %s0 = inlined_call_operand.hbm [shape: f32[8,16], index: 0, kind: input, shape index: {}]
  %s1 = inlined_call_operand.hbm [shape: f32[8,16], index: 1, kind: input, shape index: {}]
  %s2 = inlined_call_operand.hbm [shape: f32[8,32], index: 2, kind: input, shape index: {}]
  %s3 = inlined_call_operand.hbm [shape: f32[8,32], index: 3, kind: input, shape index: {}]
  %s4 = inlined_call_operand.hbm [shape: f32[32,128], index: 4, kind: input, shape index: {}]
  %s5 = inlined_call_operand.hbm [shape: f32[32,128], index: 5, kind: input, shape index: {}]
  %s6 = inlined_call_operand.hbm [shape: f32[1,128], index: 6, kind: input, shape index: {}]
  %s7 = inlined_call_operand.vmem [shape: f32[128,64], index: 7, kind: input, shape index: {}]
  %s8 = inlined_call_operand.hbm [shape: f32[1,64], index: 8, kind: input, shape index: {}]
  %s9 = inlined_call_operand.vmem [shape: f32[64,64], index: 9, kind: input, shape index: {}]
  %s10 = inlined_call_operand.hbm [shape: f32[1,64], index: 10, kind: input, shape index: {}]
  %s11 = inlined_call_operand.vmem [shape: f32[64,64], index: 11, kind: input, shape index: {}]
  %s12 = inlined_call_operand.hbm [shape: f32[1,64], index: 12, kind: input, shape index: {}]
  %s13 = inlined_call_operand.vmem [shape: f32[64,64], index: 13, kind: input, shape index: {}]
  %s14 = inlined_call_operand.hbm [shape: f32[1,64], index: 14, kind: input, shape index: {}]
  %s15 = inlined_call_operand.vmem [shape: f32[16,16], index: 15, kind: input, shape index: {}]
  %s16 = inlined_call_operand.hbm [shape: f32[16,16], index: 16, kind: input, shape index: {}]
  %s17 = inlined_call_operand.vmem [shape: f32[64,16], index: 17, kind: input, shape index: {}]
  %s18 = inlined_call_operand.hbm [shape: f32[1,16], index: 18, kind: input, shape index: {}]
  %s19 = inlined_call_operand.hbm [shape: f32[8,8], index: 19, kind: output, shape index: {0}]
  %s20 = inlined_call_operand.hbm [shape: f32[8,8], index: 20, kind: output, shape index: {1}]
  %21 = xla_tuple %s19, %s20
  %s22 = sld [smem:[#allocation0]]
  $region146: #{tpu_custom_call.1} parent=0
    _
  %s24 = ssub.s32 1, %s22
  %s25 = scalar_select 0, %s24, %s22
  $region1: #{tpu_custom_call.1} parent=0
    #allocation2 [shape = 'u8[4096]{0}', space=vmem, size = 0x1000, scoped, tag = 'input window, operand 0, single buffered']
    #allocation3 [shape = 's32[1]{0}', space=sflag, size = 0x4, scoped, tag = 'scoped memory for tpu_custom_call.1']
    #allocation4 [shape = 's32[1]{0}', space=sflag, size = 0x4, scoped, tag = 'scoped memory for tpu_custom_call.1']
    #allocation5 [shape = 'u8[4096]{0}', space=vmem, size = 0x1000, scoped, tag = 'input window, operand 1, single buffered']
    #allocation6 [shape = 's32[1]{0}', space=sflag, size = 0x4, scoped, tag = 'scoped memory for tpu_custom_call.1']
    #allocation7 [shape = 'u8[4096]{0}', space=vmem, size = 0x1000, scoped, tag = 'input window, operand 2, single buffered']
    #allocation8 [shape = 'u8[4096]{0}', space=vmem, size = 0x1000, scoped, tag = 'input window, operand 3, single buffered']
    #allocation9 [shape = 's32[1]{0}', space=sflag, size = 0x4, scoped, tag = 'scoped memory for tpu_custom_call.1']
    #allocation10 [shape = 'u8[16384]{0}', space=vmem, size = 0x4000, scoped, tag = 'input window, operand 4, single buffered']
    #allocation11 [shape = 'u8[16384]{0}', space=vmem, size = 0x4000, scoped, tag = 'input window, operand 5, single buffered']
    #allocation12 [shape = 's32[1]{0}', space=sflag, size = 0x4, scoped, tag = 'scoped memory for tpu_custom_call.1']
    #allocation13 [shape = 'u8[512]{0}', space=vmem, size = 0x400, scoped, tag = 'input window, operand 6, single buffered']
    #allocation14 [shape = 'u8[512]{0}', space=vmem, size = 0x400, scoped, tag = 'input window, operand 8, single buffered']
    #allocation15 [shape = 's32[1]{0}', space=sflag, size = 0x4, scoped, tag = 'scoped memory for tpu_custom_call.1']
    #allocation16 [shape = 'u8[512]{0}', space=vmem, size = 0x400, scoped, tag = 'input window, operand 10, single buffered']
    #allocation17 [shape = 'u8[512]{0}', space=vmem, size = 0x400, scoped, tag = 'input window, operand 12, single buffered']
    #allocation18 [shape = 's32[1]{0}', space=sflag, size = 0x4, scoped, tag = 'scoped memory for tpu_custom_call.1']
    #allocation19 [shape = 'u8[512]{0}', space=vmem, size = 0x400, scoped, tag = 'input window, operand 14, single buffered']
    #allocation20 [shape = 'u8[8192]{0}', space=vmem, size = 0x2000, scoped, tag = 'input window, operand 16, single buffered']
    #allocation21 [shape = 's32[1]{0}', space=sflag, size = 0x4, scoped, tag = 'scoped memory for tpu_custom_call.1']
    #allocation22 [shape = 'u8[512]{0}', space=vmem, size = 0x400, scoped, tag = 'input window, operand 18, single buffered']
    #allocation23 [shape = 'u8[4096]{0}', space=vmem, size = 0x1000, scoped, tag = 'output window, operand 0, single buffered']
    #allocation24 [shape = 'u8[4096]{0}', space=vmem, size = 0x1000, scoped, tag = 'output window, operand 1, single buffered']
    #allocation25 [shape = 's32[1]{0}', space=sflag, size = 0x4, scoped, tag = 'scoped memory for tpu_custom_call.1']
    %26 = vsyncpa [#allocation3], 0
    %27 = vsyncpa [#allocation6], 0
    %28 = vsyncpa [#allocation9], 0
    %29 = vsyncpa [#allocation12], 0
    %30 = vsyncpa [#allocation15], 0
    %31 = vsyncpa [#allocation18], 0
    %32 = vsyncpa [#allocation21], 0
    %33 = vsyncpa [#allocation4], 0
    %34 = vsyncpa [#allocation25], 0
    // Predicated region
    $region2: #{tpu_custom_call.1} parent=1 // pred_check
      _
    $region3: #{tpu_custom_call.1} parent=1 // pred_check_branch
      %36 = sbr.rel (0) target = $region5
    $region4: #{tpu_custom_call.1} parent=1 // pred_region
      %38 = vsyncadd [#allocation3], 0
      %s40 = sshll.u32 %s0, 4
      %s41 = int_to_ptr.hbm [resolvable:$true] %s40
      %s42 = sshll.u32 [#allocation2], 4
      %s43 = int_to_ptr.vmem [resolvable:$true] %s42
      %45 = dma.hbm_to_vmem [thread:$0]  %s41, 128, %s43, [#allocation3]
    $region5: #{tpu_custom_call.1} parent=1 // pred_fallthru
      _
    // Predicated region
    $region6: #{tpu_custom_call.1} parent=1 // pred_check
      _
    $region7: #{tpu_custom_call.1} parent=1 // pred_check_branch
      %47 = sbr.rel (0) target = $region9
    $region8: #{tpu_custom_call.1} parent=1 // pred_region
      %49 = vsyncadd [#allocation6], 0
      %s51 = sshll.u32 %s1, 4
      %s52 = int_to_ptr.hbm [resolvable:$true] %s51
      %s53 = sshll.u32 [#allocation5], 4
      %s54 = int_to_ptr.vmem [resolvable:$true] %s53
      %56 = dma.hbm_to_vmem [thread:$0]  %s52, 128, %s54, [#allocation6]
    $region9: #{tpu_custom_call.1} parent=1 // pred_fallthru
      _
    // Predicated region
    $region10: #{tpu_custom_call.1} parent=1 // pred_check
      _
    $region11: #{tpu_custom_call.1} parent=1 // pred_check_branch
      %58 = sbr.rel (0) target = $region13
    $region12: #{tpu_custom_call.1} parent=1 // pred_region
      %60 = vsyncadd [#allocation6], 0
      %s62 = sshll.u32 %s2, 4
      %s63 = int_to_ptr.hbm [resolvable:$true] %s62
      %s64 = sshll.u32 [#allocation7], 4
      %s65 = int_to_ptr.vmem [resolvable:$true] %s64
      %67 = dma.hbm_to_vmem [thread:$0]  %s63, 128, %s65, [#allocation6]
    $region13: #{tpu_custom_call.1} parent=1 // pred_fallthru
      _
    // Predicated region
    $region14: #{tpu_custom_call.1} parent=1 // pred_check
      _
    $region15: #{tpu_custom_call.1} parent=1 // pred_check_branch
      %69 = sbr.rel (0) target = $region17
    $region16: #{tpu_custom_call.1} parent=1 // pred_region
      %71 = vsyncadd [#allocation9], 0
      %s73 = sshll.u32 %s3, 4
      %s74 = int_to_ptr.hbm [resolvable:$true] %s73
      %s75 = sshll.u32 [#allocation8], 4
      %s76 = int_to_ptr.vmem [resolvable:$true] %s75
      %78 = dma.hbm_to_vmem [thread:$0]  %s74, 128, %s76, [#allocation9]
    $region17: #{tpu_custom_call.1} parent=1 // pred_fallthru
      _
    // Predicated region
    $region18: #{tpu_custom_call.1} parent=1 // pred_check
      _
    $region19: #{tpu_custom_call.1} parent=1 // pred_check_branch
      %80 = sbr.rel (0) target = $region21
    $region20: #{tpu_custom_call.1} parent=1 // pred_region
      %82 = vsyncadd [#allocation9], 0
      %s83 = sshll.u32 %s4, 4
      %s84 = int_to_ptr.hbm [resolvable:$true] %s83
      %s85 = sshll.u32 [#allocation10], 4
      %s86 = int_to_ptr.vmem [resolvable:$true] %s85
      %91 = dma.hbm_to_vmem [thread:$0]  %s84, 512, %s86, [#allocation9], 128, 128, 8
    $region21: #{tpu_custom_call.1} parent=1 // pred_fallthru
      _
    // Predicated region
    $region22: #{tpu_custom_call.1} parent=1 // pred_check
      _
    $region23: #{tpu_custom_call.1} parent=1 // pred_check_branch
      %93 = sbr.rel (0) target = $region25
    $region24: #{tpu_custom_call.1} parent=1 // pred_region
      %95 = vsyncadd [#allocation12], 0
      %s96 = sshll.u32 %s5, 4
      %s97 = int_to_ptr.hbm [resolvable:$true] %s96
      %s98 = sshll.u32 [#allocation11], 4
      %s99 = int_to_ptr.vmem [resolvable:$true] %s98
      %104 = dma.hbm_to_vmem [thread:$0]  %s97, 512, %s99, [#allocation12], 128, 128, 8
    $region25: #{tpu_custom_call.1} parent=1 // pred_fallthru
      _
    // Predicated region
    $region26: #{tpu_custom_call.1} parent=1 // pred_check
      _
    $region27: #{tpu_custom_call.1} parent=1 // pred_check_branch
      %106 = sbr.rel (0) target = $region29
    $region28: #{tpu_custom_call.1} parent=1 // pred_region
      %108 = vsyncadd [#allocation12], 0
      %s110 = sshll.u32 %s6, 4
      %s111 = int_to_ptr.hbm [resolvable:$true] %s110
      %s112 = sshll.u32 [#allocation13], 4
      %s113 = int_to_ptr.vmem [resolvable:$true] %s112
      %115 = dma.hbm_to_vmem [thread:$0]  %s111, 16, %s113, [#allocation12]
    $region29: #{tpu_custom_call.1} parent=1 // pred_fallthru
      _
    // Predicated region
    $region30: #{tpu_custom_call.1} parent=1 // pred_check
      _
    $region31: #{tpu_custom_call.1} parent=1 // pred_check_branch
      %117 = sbr.rel (0) target = $region33
    $region32: #{tpu_custom_call.1} parent=1 // pred_region
      _
    $region33: #{tpu_custom_call.1} parent=1 // pred_fallthru
      _
    // Predicated region
    $region34: #{tpu_custom_call.1} parent=1 // pred_check
      _
    $region35: #{tpu_custom_call.1} parent=1 // pred_check_branch
      %119 = sbr.rel (0) target = $region37
    $region36: #{tpu_custom_call.1} parent=1 // pred_region
      %121 = vsyncadd [#allocation15], 0
      %s123 = sshll.u32 %s8, 4
      %s124 = int_to_ptr.hbm [resolvable:$true] %s123
      %s125 = sshll.u32 [#allocation14], 4
      %s126 = int_to_ptr.vmem [resolvable:$true] %s125
      %128 = dma.hbm_to_vmem [thread:$0]  %s124, 16, %s126, [#allocation15]
    $region37: #{tpu_custom_call.1} parent=1 // pred_fallthru
      _
    // Predicated region
    $region38: #{tpu_custom_call.1} parent=1 // pred_check
      _
    $region39: #{tpu_custom_call.1} parent=1 // pred_check_branch
      %130 = sbr.rel (0) target = $region41
    $region40: #{tpu_custom_call.1} parent=1 // pred_region
      _
    $region41: #{tpu_custom_call.1} parent=1 // pred_fallthru
      _
    // Predicated region
    $region42: #{tpu_custom_call.1} parent=1 // pred_check
      _
    $region43: #{tpu_custom_call.1} parent=1 // pred_check_branch
      %132 = sbr.rel (0) target = $region45
    $region44: #{tpu_custom_call.1} parent=1 // pred_region
      %134 = vsyncadd [#allocation15], 0
      %s136 = sshll.u32 %s10, 4
      %s137 = int_to_ptr.hbm [resolvable:$true] %s136
      %s138 = sshll.u32 [#allocation16], 4
      %s139 = int_to_ptr.vmem [resolvable:$true] %s138
      %141 = dma.hbm_to_vmem [thread:$0]  %s137, 16, %s139, [#allocation15]
    $region45: #{tpu_custom_call.1} parent=1 // pred_fallthru
      _
    // Predicated region
    $region46: #{tpu_custom_call.1} parent=1 // pred_check
      _
    $region47: #{tpu_custom_call.1} parent=1 // pred_check_branch
      %143 = sbr.rel (0) target = $region49
    $region48: #{tpu_custom_call.1} parent=1 // pred_region
      _
    $region49: #{tpu_custom_call.1} parent=1 // pred_fallthru
      _
    // Predicated region
    $region50: #{tpu_custom_call.1} parent=1 // pred_check
      _
    $region51: #{tpu_custom_call.1} parent=1 // pred_check_branch
      %145 = sbr.rel (0) target = $region53
    $region52: #{tpu_custom_call.1} parent=1 // pred_region
      %147 = vsyncadd [#allocation18], 0
      %s149 = sshll.u32 %s12, 4
      %s150 = int_to_ptr.hbm [resolvable:$true] %s149
      %s151 = sshll.u32 [#allocation17], 4
      %s152 = int_to_ptr.vmem [resolvable:$true] %s151
      %154 = dma.hbm_to_vmem [thread:$0]  %s150, 16, %s152, [#allocation18]
    $region53: #{tpu_custom_call.1} parent=1 // pred_fallthru
      _
    // Predicated region
    $region54: #{tpu_custom_call.1} parent=1 // pred_check
      _
    $region55: #{tpu_custom_call.1} parent=1 // pred_check_branch
      %156 = sbr.rel (0) target = $region57
    $region56: #{tpu_custom_call.1} parent=1 // pred_region
      _
    $region57: #{tpu_custom_call.1} parent=1 // pred_fallthru
      _
    // Predicated region
    $region58: #{tpu_custom_call.1} parent=1 // pred_check
      _
    $region59: #{tpu_custom_call.1} parent=1 // pred_check_branch
      %158 = sbr.rel (0) target = $region61
    $region60: #{tpu_custom_call.1} parent=1 // pred_region
      %160 = vsyncadd [#allocation18], 0
      %s162 = sshll.u32 %s14, 4
      %s163 = int_to_ptr.hbm [resolvable:$true] %s162
      %s164 = sshll.u32 [#allocation19], 4
      %s165 = int_to_ptr.vmem [resolvable:$true] %s164
      %167 = dma.hbm_to_vmem [thread:$0]  %s163, 16, %s165, [#allocation18]
    $region61: #{tpu_custom_call.1} parent=1 // pred_fallthru
      _
    // Predicated region
    $region62: #{tpu_custom_call.1} parent=1 // pred_check
      _
    $region63: #{tpu_custom_call.1} parent=1 // pred_check_branch
      %169 = sbr.rel (0) target = $region65
    $region64: #{tpu_custom_call.1} parent=1 // pred_region
      _
    $region65: #{tpu_custom_call.1} parent=1 // pred_fallthru
      _
    // Predicated region
    $region66: #{tpu_custom_call.1} parent=1 // pred_check
      _
    $region67: #{tpu_custom_call.1} parent=1 // pred_check_branch
      %171 = sbr.rel (0) target = $region69
    $region68: #{tpu_custom_call.1} parent=1 // pred_region
      %173 = vsyncadd [#allocation21], 0
      %s174 = sshll.u32 %s16, 4
      %s175 = int_to_ptr.hbm [resolvable:$true] %s174
      %s176 = sshll.u32 [#allocation20], 4
      %s177 = int_to_ptr.vmem [resolvable:$true] %s176
      %182 = dma.hbm_to_vmem [thread:$0]  %s175, 256, %s177, [#allocation21], 128, 128, 8
    $region69: #{tpu_custom_call.1} parent=1 // pred_fallthru
      _
    // Predicated region
    $region70: #{tpu_custom_call.1} parent=1 // pred_check
      _
    $region71: #{tpu_custom_call.1} parent=1 // pred_check_branch
      %184 = sbr.rel (0) target = $region73
    $region72: #{tpu_custom_call.1} parent=1 // pred_region
      _
    $region73: #{tpu_custom_call.1} parent=1 // pred_fallthru
      _
    // Predicated region
    $region74: #{tpu_custom_call.1} parent=1 // pred_check
      _
    $region75: #{tpu_custom_call.1} parent=1 // pred_check_branch
      %186 = sbr.rel (0) target = $region77
    $region76: #{tpu_custom_call.1} parent=1 // pred_region
      %188 = vsyncadd [#allocation21], 0
      %s190 = sshll.u32 %s18, 4
      %s191 = int_to_ptr.hbm [resolvable:$true] %s190
      %s192 = sshll.u32 [#allocation22], 4
      %s193 = int_to_ptr.vmem [resolvable:$true] %s192
      %195 = dma.hbm_to_vmem [thread:$0]  %s191, 16, %s193, [#allocation21]
    $region77: #{tpu_custom_call.1} parent=1 // pred_fallthru
      _
    // Predicated region
    $region78: #{tpu_custom_call.1} parent=1 // pred_check
      _
    $region79: #{tpu_custom_call.1} parent=1 // pred_check_branch
      %197 = sbr.rel (0) target = $region81
    $region80: #{tpu_custom_call.1} parent=1 // pred_region
      %199 = dma.done [#allocation3], 128
    $region81: #{tpu_custom_call.1} parent=1 // pred_fallthru
      _
    // Predicated region
    $region82: #{tpu_custom_call.1} parent=1 // pred_check
      _
    $region83: #{tpu_custom_call.1} parent=1 // pred_check_branch
      %201 = sbr.rel (0) target = $region85
    $region84: #{tpu_custom_call.1} parent=1 // pred_region
      %203 = dma.done [#allocation6], 128
    $region85: #{tpu_custom_call.1} parent=1 // pred_fallthru
      _
    // Predicated region
    $region86: #{tpu_custom_call.1} parent=1 // pred_check
      _
    $region87: #{tpu_custom_call.1} parent=1 // pred_check_branch
      %205 = sbr.rel (0) target = $region89
    $region88: #{tpu_custom_call.1} parent=1 // pred_region
      %207 = dma.done [#allocation6], 128
    $region89: #{tpu_custom_call.1} parent=1 // pred_fallthru
      _
    // Predicated region
    $region90: #{tpu_custom_call.1} parent=1 // pred_check
      _
    $region91: #{tpu_custom_call.1} parent=1 // pred_check_branch
      %209 = sbr.rel (0) target = $region93
    $region92: #{tpu_custom_call.1} parent=1 // pred_region
      %211 = dma.done [#allocation9], 128
    $region93: #{tpu_custom_call.1} parent=1 // pred_fallthru
      _
    // Predicated region
    $region94: #{tpu_custom_call.1} parent=1 // pred_check
      _
    $region95: #{tpu_custom_call.1} parent=1 // pred_check_branch
      %213 = sbr.rel (0) target = $region97
    $region96: #{tpu_custom_call.1} parent=1 // pred_region
      %215 = dma.done [#allocation9], 512
    $region97: #{tpu_custom_call.1} parent=1 // pred_fallthru
      _
    // Predicated region
    $region98: #{tpu_custom_call.1} parent=1 // pred_check
      _
    $region99: #{tpu_custom_call.1} parent=1 // pred_check_branch
      %217 = sbr.rel (0) target = $region101
    $region100: #{tpu_custom_call.1} parent=1 // pred_region
      %219 = dma.done [#allocation12], 512
    $region101: #{tpu_custom_call.1} parent=1 // pred_fallthru
      _
    // Predicated region
    $region102: #{tpu_custom_call.1} parent=1 // pred_check
      _
    $region103: #{tpu_custom_call.1} parent=1 // pred_check_branch
      %221 = sbr.rel (0) target = $region105
    $region104: #{tpu_custom_call.1} parent=1 // pred_region
      %223 = dma.done [#allocation12], 16
    $region105: #{tpu_custom_call.1} parent=1 // pred_fallthru
      _
    // Predicated region
    $region106: #{tpu_custom_call.1} parent=1 // pred_check
      _
    $region107: #{tpu_custom_call.1} parent=1 // pred_check_branch
      %225 = sbr.rel (0) target = $region109
    $region108: #{tpu_custom_call.1} parent=1 // pred_region
      %227 = dma.done [#allocation15], 16
    $region109: #{tpu_custom_call.1} parent=1 // pred_fallthru
      _
    // Predicated region
    $region110: #{tpu_custom_call.1} parent=1 // pred_check
      _
    $region111: #{tpu_custom_call.1} parent=1 // pred_check_branch
      %229 = sbr.rel (0) target = $region113
    $region112: #{tpu_custom_call.1} parent=1 // pred_region
      %231 = dma.done [#allocation15], 16
    $region113: #{tpu_custom_call.1} parent=1 // pred_fallthru
      _
    // Predicated region
    $region114: #{tpu_custom_call.1} parent=1 // pred_check
      _
    $region115: #{tpu_custom_call.1} parent=1 // pred_check_branch
      %233 = sbr.rel (0) target = $region117
    $region116: #{tpu_custom_call.1} parent=1 // pred_region
      %235 = dma.done [#allocation18], 16
    $region117: #{tpu_custom_call.1} parent=1 // pred_fallthru
      _
    // Predicated region
    $region118: #{tpu_custom_call.1} parent=1 // pred_check
      _
    $region119: #{tpu_custom_call.1} parent=1 // pred_check_branch
      %237 = sbr.rel (0) target = $region121
    $region120: #{tpu_custom_call.1} parent=1 // pred_region
      %239 = dma.done [#allocation18], 16
    $region121: #{tpu_custom_call.1} parent=1 // pred_fallthru
      _
    // Predicated region
    $region122: #{tpu_custom_call.1} parent=1 // pred_check
      _
    $region123: #{tpu_custom_call.1} parent=1 // pred_check_branch
      %241 = sbr.rel (0) target = $region125
    $region124: #{tpu_custom_call.1} parent=1 // pred_region
      %243 = dma.done [#allocation21], 256
    $region125: #{tpu_custom_call.1} parent=1 // pred_fallthru
      _
    // Predicated region
    $region126: #{tpu_custom_call.1} parent=1 // pred_check
      _
    $region127: #{tpu_custom_call.1} parent=1 // pred_check_branch
      %245 = sbr.rel (0) target = $region129
    $region128: #{tpu_custom_call.1} parent=1 // pred_region
      %247 = dma.done [#allocation21], 16
    $region129: #{tpu_custom_call.1} parent=1 // pred_fallthru
      _
    %v248 = vld [vmem:[#allocation7] sm:$0xff]
    %v249 = vld [vmem:[#allocation10] sm:$0xff]
    %v250 = vld [vmem:[#allocation10 + $0x8] sm:$0xff]
    %v251 = vld [vmem:[#allocation10 + $0x10] sm:$0xff]
    %v252 = vld [vmem:[#allocation10 + $0x18] sm:$0xff]
    %v253 = vld [vmem:[#allocation8] sm:$0xff]
    %v254 = vld [vmem:[#allocation11] sm:$0xff]
    %v255 = vld [vmem:[#allocation11 + $0x8] sm:$0xff]
    %v256 = vld [vmem:[#allocation11 + $0x10] sm:$0xff]
    %v257 = vld [vmem:[#allocation11 + $0x18] sm:$0xff]
    %vm258 = vcmask 261120
    %v260 = vsel %vm258, %v253, 0
    %262 = vmatpush.msra.mxu0 0.0
    %263 = vmatpush.msra.mxu0 0.0
    %264 = vmatpush.msra.mxu0 0.0
    %265 = vmatpush.msra.mxu0 0.0
    %266 = vmatpush.msra.mxu0 0.0
    %267 = vmatpush.msra.mxu0 0.0
    %268 = vmatpush.msra.mxu0 0.0
    %269 = vmatpush.msra.mxu0 0.0
    %270 = vmatpush.msra.mxu0 0.0
    %271 = vmatpush.msra.mxu0 0.0
    %272 = vmatpush.msra.mxu0 0.0
    %273 = vmatpush.msra.mxu0 0.0
    %274 = vmatpush.msra.mxu0 %v257
    %275 = vmatpush.msra.mxu0 %v256
    %276 = vmatpush.msra.mxu0 %v255
    %277 = vmatpush.msra.mxu0 %v254
    %278 = vmatmul.f32.gmra.mxu0 %v260
    %v279 = vpop.f32.mrf.mxu0
    %v280 = vadd.f32 0.0, %v279
    %281 = vdwg.mxu0
    %v283 = vsel %vm258, %v248, 0
    %285 = vmatpush.msra.mxu0 0.0
    %286 = vmatpush.msra.mxu0 0.0
    %287 = vmatpush.msra.mxu0 0.0
    %288 = vmatpush.msra.mxu0 0.0
    %289 = vmatpush.msra.mxu0 0.0
    %290 = vmatpush.msra.mxu0 0.0
    %291 = vmatpush.msra.mxu0 0.0
    %292 = vmatpush.msra.mxu0 0.0
    %293 = vmatpush.msra.mxu0 0.0
    %294 = vmatpush.msra.mxu0 0.0
    %295 = vmatpush.msra.mxu0 0.0
    %296 = vmatpush.msra.mxu0 0.0
    %297 = vmatpush.msra.mxu0 %v252
    %298 = vmatpush.msra.mxu0 %v251
    %299 = vmatpush.msra.mxu0 %v250
    %300 = vmatpush.msra.mxu0 %v249
    %301 = vmatmul.f32.gmra.mxu0 %v283
    %v302 = vpop.f32.mrf.mxu0
    %v303 = vadd.f32 %v280, %v302
    %304 = vdwg.mxu0
    %v305 = vld [vmem:[#allocation13] sm:$0x1]
    %v307 = vperm.slane %v305, 0
    %v309 = vadd.f32 %v303, %v307
    %v310 = vmax.f32 %v309, 0.0
    %v311 = vld [vmem:[%s7] sm:$0xff]
    %v312 = vld [vmem:[%s7 + $0x8] sm:$0xff]
    %v313 = vld [vmem:[%s7 + $0x10] sm:$0xff]
    %v314 = vld [vmem:[%s7 + $0x18] sm:$0xff]
    %v315 = vld [vmem:[%s7 + $0x20] sm:$0xff]
    %v316 = vld [vmem:[%s7 + $0x28] sm:$0xff]
    %v317 = vld [vmem:[%s7 + $0x30] sm:$0xff]
    %v318 = vld [vmem:[%s7 + $0x38] sm:$0xff]
    %v319 = vld [vmem:[%s7 + $0x40] sm:$0xff]
    %v320 = vld [vmem:[%s7 + $0x48] sm:$0xff]
    %v321 = vld [vmem:[%s7 + $0x50] sm:$0xff]
    %v322 = vld [vmem:[%s7 + $0x58] sm:$0xff]
    %v323 = vld [vmem:[%s7 + $0x60] sm:$0xff]
    %v324 = vld [vmem:[%s7 + $0x68] sm:$0xff]
    %v325 = vld [vmem:[%s7 + $0x70] sm:$0xff]
    %v326 = vld [vmem:[%s7 + $0x78] sm:$0xff]
    %v327 = vld [vmem:[#allocation14] sm:$0x1]
    %v329 = vperm.slane %v327, 0
    %331 = vmatpush.msra.mxu0 %v326
    %332 = vmatpush.msra.mxu0 %v325
    %333 = vmatpush.msra.mxu0 %v324
    %334 = vmatpush.msra.mxu0 %v323
    %335 = vmatpush.msra.mxu0 %v322
    %336 = vmatpush.msra.mxu0 %v321
    %337 = vmatpush.msra.mxu0 %v320
    %338 = vmatpush.msra.mxu0 %v319
    %339 = vmatpush.msra.mxu0 %v318
    %340 = vmatpush.msra.mxu0 %v317
    %341 = vmatpush.msra.mxu0 %v316
    %342 = vmatpush.msra.mxu0 %v315
    %343 = vmatpush.msra.mxu0 %v314
    %344 = vmatpush.msra.mxu0 %v313
    %345 = vmatpush.msra.mxu0 %v312
    %346 = vmatpush.msra.mxu0 %v311
    %347 = vmatmul.f32.gmra.mxu0 %v310
    %v348 = vpop.f32.mrf.mxu0
    %v349 = vadd.f32 %v329, %v348
    %350 = vdwg.mxu0
    %v351 = vmax.f32 %v349, 0.0
    %v352 = vld [vmem:[%s9] sm:$0xff]
    %v353 = vld [vmem:[%s9 + $0x8] sm:$0xff]
    %v354 = vld [vmem:[%s9 + $0x10] sm:$0xff]
    %v355 = vld [vmem:[%s9 + $0x18] sm:$0xff]
    %v356 = vld [vmem:[%s9 + $0x20] sm:$0xff]
    %v357 = vld [vmem:[%s9 + $0x28] sm:$0xff]
    %v358 = vld [vmem:[%s9 + $0x30] sm:$0xff]
    %v359 = vld [vmem:[%s9 + $0x38] sm:$0xff]
    %v360 = vld [vmem:[#allocation16] sm:$0x1]
    %v362 = vperm.slane %v360, 0
    %vm364 = vcmask 523264
    %v366 = vsel %vm364, %v351, 0
    %368 = vmatpush.msra.mxu0 0.0
    %369 = vmatpush.msra.mxu0 0.0
    %370 = vmatpush.msra.mxu0 0.0
    %371 = vmatpush.msra.mxu0 0.0
    %372 = vmatpush.msra.mxu0 0.0
    %373 = vmatpush.msra.mxu0 0.0
    %374 = vmatpush.msra.mxu0 0.0
    %375 = vmatpush.msra.mxu0 0.0
    %376 = vmatpush.msra.mxu0 %v359
    %377 = vmatpush.msra.mxu0 %v358
    %378 = vmatpush.msra.mxu0 %v357
    %379 = vmatpush.msra.mxu0 %v356
    %380 = vmatpush.msra.mxu0 %v355
    %381 = vmatpush.msra.mxu0 %v354
    %382 = vmatpush.msra.mxu0 %v353
    %383 = vmatpush.msra.mxu0 %v352
    %384 = vmatmul.f32.gmra.mxu0 %v366
    %v385 = vpop.f32.mrf.mxu0
    %v386 = vadd.f32 %v362, %v385
    %387 = vdwg.mxu0
    %v388 = vmax.f32 %v386, 0.0
    %v389 = vld [vmem:[%s11] sm:$0xff]
    %v390 = vld [vmem:[%s11 + $0x8] sm:$0xff]
    %v391 = vld [vmem:[%s11 + $0x10] sm:$0xff]
    %v392 = vld [vmem:[%s11 + $0x18] sm:$0xff]
    %v393 = vld [vmem:[%s11 + $0x20] sm:$0xff]
    %v394 = vld [vmem:[%s11 + $0x28] sm:$0xff]
    %v395 = vld [vmem:[%s11 + $0x30] sm:$0xff]
    %v396 = vld [vmem:[%s11 + $0x38] sm:$0xff]
    %v397 = vld [vmem:[#allocation17] sm:$0x1]
    %v399 = vperm.slane %v397, 0
    %v402 = vsel %vm364, %v388, 0
    %404 = vmatpush.msra.mxu0 0.0
    %405 = vmatpush.msra.mxu0 0.0
    %406 = vmatpush.msra.mxu0 0.0
    %407 = vmatpush.msra.mxu0 0.0
    %408 = vmatpush.msra.mxu0 0.0
    %409 = vmatpush.msra.mxu0 0.0
    %410 = vmatpush.msra.mxu0 0.0
    %411 = vmatpush.msra.mxu0 0.0
    %412 = vmatpush.msra.mxu0 %v396
    %413 = vmatpush.msra.mxu0 %v395
    %414 = vmatpush.msra.mxu0 %v394
    %415 = vmatpush.msra.mxu0 %v393
    %416 = vmatpush.msra.mxu0 %v392
    %417 = vmatpush.msra.mxu0 %v391
    %418 = vmatpush.msra.mxu0 %v390
    %419 = vmatpush.msra.mxu0 %v389
    %420 = vmatmul.f32.gmra.mxu0 %v402
    %v421 = vpop.f32.mrf.mxu0
    %v422 = vadd.f32 %v399, %v421
    %423 = vdwg.mxu0
    %v424 = vmax.f32 %v422, 0.0
    %v426 = vsel %vm364, %v424, 0
    %428 = vmatpush.msra.mxu0 0.0
    %429 = vmatpush.msra.mxu0 0.0
    %430 = vmatpush.msra.mxu0 0.0
    %431 = vmatpush.msra.mxu0 0.0
    %432 = vmatpush.msra.mxu0 0.0
    %433 = vmatpush.msra.mxu0 0.0
    %434 = vmatpush.msra.mxu0 0.0
    %435 = vmatpush.msra.mxu0 0.0
    %436 = vmatpush.msra.mxu0 %v396
    %437 = vmatpush.msra.mxu0 %v395
    %438 = vmatpush.msra.mxu0 %v394
    %439 = vmatpush.msra.mxu0 %v393
    %440 = vmatpush.msra.mxu0 %v392
    %441 = vmatpush.msra.mxu0 %v391
    %442 = vmatpush.msra.mxu0 %v390
    %443 = vmatpush.msra.mxu0 %v389
    %444 = vmatmul.f32.gmra.mxu0 %v426
    %v445 = vpop.f32.mrf.mxu0
    %v446 = vadd.f32 %v399, %v445
    %447 = vdwg.mxu0
    %v448 = vmax.f32 %v446, 0.0
    %v449 = vld [vmem:[%s13] sm:$0xff]
    %v450 = vld [vmem:[%s13 + $0x8] sm:$0xff]
    %v451 = vld [vmem:[%s13 + $0x10] sm:$0xff]
    %v452 = vld [vmem:[%s13 + $0x18] sm:$0xff]
    %v453 = vld [vmem:[%s13 + $0x20] sm:$0xff]
    %v454 = vld [vmem:[%s13 + $0x28] sm:$0xff]
    %v455 = vld [vmem:[%s13 + $0x30] sm:$0xff]
    %v456 = vld [vmem:[%s13 + $0x38] sm:$0xff]
    %v457 = vld [vmem:[#allocation19] sm:$0x1]
    %v459 = vperm.slane %v457, 0
    %v462 = vsel %vm364, %v448, 0
    %464 = vmatpush.msra.mxu0 0.0
    %465 = vmatpush.msra.mxu0 0.0
    %466 = vmatpush.msra.mxu0 0.0
    %467 = vmatpush.msra.mxu0 0.0
    %468 = vmatpush.msra.mxu0 0.0
    %469 = vmatpush.msra.mxu0 0.0
    %470 = vmatpush.msra.mxu0 0.0
    %471 = vmatpush.msra.mxu0 0.0
    %472 = vmatpush.msra.mxu0 %v456
    %473 = vmatpush.msra.mxu0 %v455
    %474 = vmatpush.msra.mxu0 %v454
    %475 = vmatpush.msra.mxu0 %v453
    %476 = vmatpush.msra.mxu0 %v452
    %477 = vmatpush.msra.mxu0 %v451
    %478 = vmatpush.msra.mxu0 %v450
    %479 = vmatpush.msra.mxu0 %v449
    %480 = vmatmul.f32.gmra.mxu0 %v462
    %v481 = vpop.f32.mrf.mxu0
    %v482 = vadd.f32 %v459, %v481
    %483 = vdwg.mxu0
    %v484 = vld [vmem:[#allocation2] sm:$0xff]
    %v485 = vld [vmem:[%s15] sm:$0xff]
    %v486 = vld [vmem:[%s15 + $0x8] sm:$0xff]
    %v487 = vld [vmem:[#allocation5] sm:$0xff]
    %v488 = vld [vmem:[#allocation20] sm:$0xff]
    %v489 = vld [vmem:[#allocation20 + $0x8] sm:$0xff]
    %vm490 = vcmask 130048
    %v492 = vsel %vm490, %v487, 0
    %494 = vmatpush.msra.mxu0 0.0
    %495 = vmatpush.msra.mxu0 0.0
    %496 = vmatpush.msra.mxu0 0.0
    %497 = vmatpush.msra.mxu0 0.0
    %498 = vmatpush.msra.mxu0 0.0
    %499 = vmatpush.msra.mxu0 0.0
    %500 = vmatpush.msra.mxu0 0.0
    %501 = vmatpush.msra.mxu0 0.0
    %502 = vmatpush.msra.mxu0 0.0
    %503 = vmatpush.msra.mxu0 0.0
    %504 = vmatpush.msra.mxu0 0.0
    %505 = vmatpush.msra.mxu0 0.0
    %506 = vmatpush.msra.mxu0 0.0
    %507 = vmatpush.msra.mxu0 0.0
    %508 = vmatpush.msra.mxu0 %v489
    %509 = vmatpush.msra.mxu0 %v488
    %510 = vmatmul.f32.gmra.mxu0 %v492
    %v511 = vpop.f32.mrf.mxu0
    %v512 = vadd.f32 0.0, %v511
    %513 = vdwg.mxu0
    %v515 = vsel %vm490, %v484, 0
    %517 = vmatpush.msra.mxu0 0.0
    %518 = vmatpush.msra.mxu0 0.0
    %519 = vmatpush.msra.mxu0 0.0
    %520 = vmatpush.msra.mxu0 0.0
    %521 = vmatpush.msra.mxu0 0.0
    %522 = vmatpush.msra.mxu0 0.0
    %523 = vmatpush.msra.mxu0 0.0
    %524 = vmatpush.msra.mxu0 0.0
    %525 = vmatpush.msra.mxu0 0.0
    %526 = vmatpush.msra.mxu0 0.0
    %527 = vmatpush.msra.mxu0 0.0
    %528 = vmatpush.msra.mxu0 0.0
    %529 = vmatpush.msra.mxu0 0.0
    %530 = vmatpush.msra.mxu0 0.0
    %531 = vmatpush.msra.mxu0 %v486
    %532 = vmatpush.msra.mxu0 %v485
    %533 = vmatmul.f32.gmra.mxu0 %v515
    %v534 = vpop.f32.mrf.mxu0
    %v535 = vadd.f32 %v512, %v534
    %536 = vdwg.mxu0
    %v537 = vld [vmem:[%s17] sm:$0xff]
    %v538 = vld [vmem:[%s17 + $0x8] sm:$0xff]
    %v539 = vld [vmem:[%s17 + $0x10] sm:$0xff]
    %v540 = vld [vmem:[%s17 + $0x18] sm:$0xff]
    %v541 = vld [vmem:[%s17 + $0x20] sm:$0xff]
    %v542 = vld [vmem:[%s17 + $0x28] sm:$0xff]
    %v543 = vld [vmem:[%s17 + $0x30] sm:$0xff]
    %v544 = vld [vmem:[%s17 + $0x38] sm:$0xff]
    %v546 = vsel %vm364, %v482, 0
    %548 = vmatpush.msra.mxu0 0.0
    %549 = vmatpush.msra.mxu0 0.0
    %550 = vmatpush.msra.mxu0 0.0
    %551 = vmatpush.msra.mxu0 0.0
    %552 = vmatpush.msra.mxu0 0.0
    %553 = vmatpush.msra.mxu0 0.0
    %554 = vmatpush.msra.mxu0 0.0
    %555 = vmatpush.msra.mxu0 0.0
    %556 = vmatpush.msra.mxu0 %v544
    %557 = vmatpush.msra.mxu0 %v543
    %558 = vmatpush.msra.mxu0 %v542
    %559 = vmatpush.msra.mxu0 %v541
    %560 = vmatpush.msra.mxu0 %v540
    %561 = vmatpush.msra.mxu0 %v539
    %562 = vmatpush.msra.mxu0 %v538
    %563 = vmatpush.msra.mxu0 %v537
    %564 = vmatmul.f32.gmra.mxu0 %v546
    %v565 = vpop.f32.mrf.mxu0
    %v566 = vadd.f32 0.0, %v565
    %567 = vdwg.mxu0
    %v568 = vadd.f32 %v535, %v566
    %v569 = vld [vmem:[#allocation22] sm:$0x1]
    %v571 = vperm.slane %v569, 0
    %v573 = vadd.f32 %v568, %v571
    %vm574 = vcmask 64512
    %575 = vst.msk [vmem:[#allocation23] sm:$0xff] %vm574, %v573
    %577 = vrot.lane.b32.xlu0 %v573, 120
    %v578 = vpop.permute.xlu0 %577
    %580 = vst.msk [vmem:[#allocation24] sm:$0xff] %vm574, %v578
    // Predicated region
    $region130: #{tpu_custom_call.1} parent=1 // pred_check
      _
    $region131: #{tpu_custom_call.1} parent=1 // pred_check_branch
      %582 = sbr.rel (0) target = $region133
    $region132: #{tpu_custom_call.1} parent=1 // pred_region
      %584 = vsyncadd [#allocation4], 0
      %s586 = sshll.u32 [#allocation23], 4
      %s587 = int_to_ptr.vmem [resolvable:$true] %s586
      %s588 = sshll.u32 %s19, 4
      %s589 = int_to_ptr.hbm [resolvable:$true] %s588
      %591 = dma.vmem_to_hbm [thread:$0]  %s587, 128, %s589, [#allocation4]
    $region133: #{tpu_custom_call.1} parent=1 // pred_fallthru
      _
    // Predicated region
    $region134: #{tpu_custom_call.1} parent=1 // pred_check
      _
    $region135: #{tpu_custom_call.1} parent=1 // pred_check_branch
      %593 = sbr.rel (0) target = $region137
    $region136: #{tpu_custom_call.1} parent=1 // pred_region
      %595 = vsyncadd [#allocation25], 0
      %s597 = sshll.u32 [#allocation24], 4
      %s598 = int_to_ptr.vmem [resolvable:$true] %s597
      %s599 = sshll.u32 %s20, 4
      %s600 = int_to_ptr.hbm [resolvable:$true] %s599
      %602 = dma.vmem_to_hbm [thread:$0]  %s598, 128, %s600, [#allocation25]
    $region137: #{tpu_custom_call.1} parent=1 // pred_fallthru
      _
    // Predicated region
    $region138: #{tpu_custom_call.1} parent=1 // pred_check
      _
    $region139: #{tpu_custom_call.1} parent=1 // pred_check_branch
      %604 = sbr.rel (0) target = $region141
    $region140: #{tpu_custom_call.1} parent=1 // pred_region
      %606 = dma.done [#allocation4], 128
    $region141: #{tpu_custom_call.1} parent=1 // pred_fallthru
      _
    // Predicated region
    $region142: #{tpu_custom_call.1} parent=1 // pred_check
      _
    $region143: #{tpu_custom_call.1} parent=1 // pred_check_branch
      %608 = sbr.rel (0) target = $region145
    $region144: #{tpu_custom_call.1} parent=1 // pred_region
      %610 = dma.done [#allocation25], 128
    $region145: #{tpu_custom_call.1} parent=1 // pred_fallthru
      _
    %611 = vsyncpa [#allocation3], 1
    %612 = vsyncpa [#allocation6], 1
    %613 = vsyncpa [#allocation9], 1
    %614 = vsyncpa [#allocation12], 1
    %615 = vsyncpa [#allocation15], 1
    %616 = vsyncpa [#allocation18], 1
    %617 = vsyncpa [#allocation21], 1
    %618 = vsyncpa [#allocation4], 1
    %619 = vsyncpa [#allocation25], 1

</llo_original>
